<compile_context>
chip_gen: v5e
topology: v5e:2x2
jax: 0.10.0
libtpu: 0.0.40
codegen_flags: <defaults>
</compile_context>

<pallas_src>
import jax
import jax.numpy as jnp
from jax.experimental import pallas as pl
from jax.experimental.pallas import tpu as pltpu


DROP_P = 0.1
_KEEP_SCALE = 1.0 / (1.0 - DROP_P)
_DROP_THRESH = int(round(DROP_P * (1 << 32)))   # keep iff bits >= thresh  (P=0.9)
_INV_SQRT2 = 1.0 / (2.0 ** 0.5)


def _attn_dropout_kernel(x_ref, k_ref, v_ref, bits_ref, o_ref):
    # x_ref: (M, D) f32, k_ref/v_ref: (N, D) f32, bits_ref: (M, N) u32, o_ref: (M, D) f32
    x = x_ref[...] * jnp.float32(_INV_SQRT2)      # fold score scale before the MXU
    k = k_ref[...]
    v = v_ref[...]

    # scores = (x / sqrt(2)) @ key^T  -- contraction expressed directly (no transpose)
    s = jax.lax.dot_general(
        x, k,
        dimension_numbers=(((1,), (1,)), ((), ())),
        preferred_element_type=jnp.float32,
    )  # (M, N)

    # softmax over the last axis
    m = jnp.max(s, axis=-1, keepdims=True)
    e = jnp.exp(s - m)
    denom = jnp.sum(e, axis=-1, keepdims=True)
    p = e * pl.reciprocal(denom, approx=True)     # EUP vrcp; plenty accurate here

    # inverted dropout via integer threshold on uniform uint32 bits
    keep = bits_ref[...] >= jnp.uint32(_DROP_THRESH)
    p_dropped = jnp.where(keep, p * jnp.float32(_KEEP_SCALE), jnp.float32(0.0))

    # out = dropped @ value
    o_ref[...] = jnp.dot(p_dropped, v, preferred_element_type=jnp.float32)


@jax.jit
def model_forward(x1, key_param, value_param, rng_key):
    """x1: (B, S, D); key_param/value_param: (N, D); rng_key: jax PRNG key."""
    B, S, D = x1.shape
    N = key_param.shape[0]
    M = B * S

    x2d = x1.reshape(M, D).astype(jnp.float32)
    kf = key_param.astype(jnp.float32)
    vf = value_param.astype(jnp.float32)
    # Fresh dropout bits every call (seeded by the caller's key).
    bits = jax.random.bits(rng_key, (M, N), dtype=jnp.uint32)

    vmem = pl.BlockSpec(memory_space=pltpu.MemorySpace.VMEM)
    itemsize = 4
    cost = pl.CostEstimate(
        flops=4 * M * N * D,                                   # two tiny matmuls
        transcendentals=M * N,                                 # exp
        bytes_accessed=itemsize * (M * D + 2 * N * D + M * N + M * D),
    )

    # Problem is ~2 KiB total: no grid / tiling — one VMEM-resident invocation.
    out2d = pl.pallas_call(
        _attn_dropout_kernel,
        out_shape=jax.ShapeDtypeStruct((M, D), jnp.float32),
        in_specs=[vmem, vmem, vmem, vmem],
        out_specs=vmem,
        cost_estimate=cost,
    )(x2d, kf, vf, bits)

    return out2d.reshape(B, S, D)


if __name__ == "__main__":
    root = jax.random.PRNGKey(0)
    k_x, k_drop = jax.random.split(root)

    # Input consistent with the module: x1 = torch.randn(1, 16, 16)
    x1 = jax.random.normal(k_x, (1, 16, 16), dtype=jnp.float32)

    # Parameters exactly as in __init__: key = ones(10, 16), value = ones(10, 16)
    key_param = jnp.ones((10, 16), dtype=jnp.float32)
    value_param = jnp.ones((10, 16), dtype=jnp.float32)

    out = model_forward(x1, key_param, value_param, k_drop)
    out = jax.block_until_ready(out)

    assert out.shape == (1, 16, 16)
    assert out.dtype == jnp.float32
    assert bool(jnp.all(jnp.isfinite(out)))

    print("KERNEL_OK")
</pallas_src>

<mosaic_0001>
module attributes {stable_mosaic.version = 11 : i64} {
  func.func @_attn_dropout_kernel(%arg0: memref<16x16xf32, #tpu.memory_space<vmem>>, %arg1: memref<10x16xf32, #tpu.memory_space<vmem>>, %arg2: memref<10x16xf32, #tpu.memory_space<vmem>>, %arg3: memref<16x10xi32, #tpu.memory_space<vmem>>, %arg4: memref<16x16xf32, #tpu.memory_space<vmem>>) attributes {dimension_semantics = [], scalar_prefetch = 0 : i64, scratch_operands = 0 : i64, tpu.core_type = #tpu.core_type<tc>} {
    %c0 = arith.constant 0 : index
    %c0_0 = arith.constant 0 : index
    %0 = vector.load %arg0[%c0, %c0_0] : memref<16x16xf32, #tpu.memory_space<vmem>>, vector<16x16xf32>
    %cst = arith.constant 0.707106769 : f32
    %1 = vector.broadcast %cst : f32 to vector<16x16xf32>
    %2 = arith.mulf %0, %1 : vector<16x16xf32>
    %c0_1 = arith.constant 0 : index
    %c0_2 = arith.constant 0 : index
    %3 = vector.load %arg1[%c0_1, %c0_2] : memref<10x16xf32, #tpu.memory_space<vmem>>, vector<10x16xf32>
    %c0_3 = arith.constant 0 : index
    %c0_4 = arith.constant 0 : index
    %4 = vector.load %arg2[%c0_3, %c0_4] : memref<10x16xf32, #tpu.memory_space<vmem>>, vector<10x16xf32>
    %cst_5 = arith.constant dense<0.000000e+00> : vector<16x10xf32>
    %5 = tpu.matmul %2, %3, %cst_5 {dimension_numbers = #tpu.dot_dimension_numbers<[1], [1], [0], [0], [0, 0, 1, 0], [], []>} : vector<16x16xf32>, vector<10x16xf32>, vector<16x10xf32> -> vector<16x10xf32>
    %cst_6 = arith.constant dense<0xFF800000> : vector<16xf32>
    %6 = vector.multi_reduction <maximumf>, %5, %cst_6 [1] : vector<16x10xf32> to vector<16xf32>
    %7 = vector.shape_cast %6 : vector<16xf32> to vector<16x1xf32>
    %8 = vector.broadcast %7 : vector<16x1xf32> to vector<16x10xf32>
    %9 = arith.subf %5, %8 : vector<16x10xf32>
    %10 = math.exp %9 : vector<16x10xf32>
    %cst_7 = arith.constant dense<0.000000e+00> : vector<16xf32>
    %11 = vector.multi_reduction <add>, %10, %cst_7 [1] : vector<16x10xf32> to vector<16xf32>
    %12 = vector.shape_cast %11 : vector<16xf32> to vector<16x1xf32>
    %13 = tpu.reciprocal %12 {approx = true} : vector<16x1xf32> -> vector<16x1xf32>
    %14 = vector.broadcast %13 : vector<16x1xf32> to vector<16x10xf32>
    %15 = arith.mulf %10, %14 : vector<16x10xf32>
    %c0_8 = arith.constant 0 : index
    %c0_9 = arith.constant 0 : index
    %16 = vector.load %arg3[%c0_8, %c0_9] : memref<16x10xi32, #tpu.memory_space<vmem>>, vector<16x10xi32>
    %c429496730_i32 = arith.constant 429496730 : i32
    %17 = vector.broadcast %c429496730_i32 : i32 to vector<16x10xi32>
    %18 = arith.cmpi uge, %16, %17 : vector<16x10xi32>
    %cst_10 = arith.constant 1.11111116 : f32
    %19 = vector.broadcast %cst_10 : f32 to vector<16x10xf32>
    %20 = arith.mulf %15, %19 : vector<16x10xf32>
    %cst_11 = arith.constant 0.000000e+00 : f32
    %21 = vector.broadcast %cst_11 : f32 to vector<16x10xf32>
    %22 = arith.select %18, %20, %21 : vector<16x10xi1>, vector<16x10xf32>
    %cst_12 = arith.constant dense<0.000000e+00> : vector<16x16xf32>
    %23 = tpu.matmul %22, %4, %cst_12 {dimension_numbers = #tpu.dot_dimension_numbers<[1], [0], [0], [1], [0, 0, 1, 1], [], []>} : vector<16x10xf32>, vector<10x16xf32>, vector<16x16xf32> -> vector<16x16xf32>
    %c0_13 = arith.constant 0 : index
    %c0_14 = arith.constant 0 : index
    %24 = vector.load %arg4[%c0_13, %c0_14] : memref<16x16xf32, #tpu.memory_space<vmem>>, vector<16x16xf32>
    tpu.vector_store %arg4[%c0_13, %c0_14], %23 {strides = array<i32>} : memref<16x16xf32, #tpu.memory_space<vmem>>, vector<16x16xf32>,
    return
  }
}

</mosaic_0001>

<llo_original>
// kernel: model_forward.1
$region0: #{model_forward.1}
  #allocation0 [shape = 'u32[]', space=smem, size = 0x4, offset = 0x4, fixed_abs, tag = 'smem constant byte address 0x4 - core index']
  #allocation1 [shape = 'u32[72,128]{1,0:T(1,128)}', space=vmem, size = 0x9000, scoped, tag = 'internal scratch']
  %s0 = inlined_call_operand.vmem [shape: f32[16,16], index: 0, kind: input, shape index: {}]
  %s1 = inlined_call_operand.vmem [shape: f32[10,16], index: 1, kind: input, shape index: {}]
  %s2 = inlined_call_operand.hbm [shape: f32[10,16], index: 2, kind: input, shape index: {}]
  %s3 = inlined_call_operand.vmem [shape: u32[16,10], index: 3, kind: input, shape index: {}]
  %s4 = inlined_call_operand.hbm [shape: f32[16,16], index: 4, kind: output, shape index: {}]
  %s5 = sld [smem:[#allocation0]]
  $region30: #{model_forward.1} parent=0
    _
  %s7 = ssub.s32 1, %s5
  %s8 = scalar_select 0, %s7, %s5
  $region1: #{model_forward.1} parent=0
    #allocation2 [shape = 'u8[8192]{0}', space=vmem, size = 0x2000, scoped, tag = 'input window, operand 2, single buffered']
    #allocation3 [shape = 's32[1]{0}', space=sflag, size = 0x4, scoped, tag = 'scoped memory for model_forward.1']
    #allocation4 [shape = 's32[1]{0}', space=sflag, size = 0x4, scoped, tag = 'scoped memory for model_forward.1']
    #allocation5 [shape = 'u8[8192]{0}', space=vmem, size = 0x2000, scoped, tag = 'output window, operand 0, single buffered']
    %9 = vsyncpa [#allocation3], 0
    %10 = vsyncpa [#allocation4], 0
    // Predicated region
    $region2: #{model_forward.1} parent=1 // pred_check
      _
    $region3: #{model_forward.1} parent=1 // pred_check_branch
      %12 = sbr.rel (0) target = $region5
    $region4: #{model_forward.1} parent=1 // pred_region
      _
    $region5: #{model_forward.1} parent=1 // pred_fallthru
      _
    // Predicated region
    $region6: #{model_forward.1} parent=1 // pred_check
      _
    $region7: #{model_forward.1} parent=1 // pred_check_branch
      %14 = sbr.rel (0) target = $region9
    $region8: #{model_forward.1} parent=1 // pred_region
      _
    $region9: #{model_forward.1} parent=1 // pred_fallthru
      _
    // Predicated region
    $region10: #{model_forward.1} parent=1 // pred_check
      _
    $region11: #{model_forward.1} parent=1 // pred_check_branch
      %16 = sbr.rel (0) target = $region13
    $region12: #{model_forward.1} parent=1 // pred_region
      %18 = vsyncadd [#allocation3], 0
      %s19 = sshll.u32 %s2, 4
      %s20 = int_to_ptr.hbm [resolvable:$true] %s19
      %s21 = sshll.u32 [#allocation2], 4
      %s22 = int_to_ptr.vmem [resolvable:$true] %s21
      %27 = dma.hbm_to_vmem [thread:$0]  %s20, 256, %s22, [#allocation3], 128, 128, 8
    $region13: #{model_forward.1} parent=1 // pred_fallthru
      _
    // Predicated region
    $region14: #{model_forward.1} parent=1 // pred_check
      _
    $region15: #{model_forward.1} parent=1 // pred_check_branch
      %29 = sbr.rel (0) target = $region17
    $region16: #{model_forward.1} parent=1 // pred_region
      _
    $region17: #{model_forward.1} parent=1 // pred_fallthru
      _
    // Predicated region
    $region18: #{model_forward.1} parent=1 // pred_check
      _
    $region19: #{model_forward.1} parent=1 // pred_check_branch
      %31 = sbr.rel (0) target = $region21
    $region20: #{model_forward.1} parent=1 // pred_region
      %33 = dma.done [#allocation3], 256
    $region21: #{model_forward.1} parent=1 // pred_fallthru
      _
    %v34 = vld [vmem:[%s0] sm:$0xff]
    %v35 = vld [vmem:[%s0 + $0x8] sm:$0xff]
    %v36 = vmul.f32 %v34, 0.70710677
    %v37 = vmul.f32 %v35, 0.70710677
    %v38 = vld [vmem:[%s1] sm:$0xff]
    %v39 = vld [vmem:[%s1 + $0x8] sm:$0x3]
    %v40 = vld [vmem:[#allocation2] sm:$0xff]
    %v41 = vld [vmem:[#allocation2 + $0x8] sm:$0x3]
    %vm42 = vcmask 130048
    %v44 = vsel %vm42, %v36, 0
    %v47 = vsel %vm42, %v37, 0
    %v50 = vsel %vm42, %v38, 0
    %v53 = vsel %vm42, %v39, 0
    %55 = vmatpush.xpose.msra.mxu0 0.0
    %56 = vmatpush.xpose.msra.mxu0 0.0
    %57 = vmatpush.xpose.msra.mxu0 0.0
    %58 = vmatpush.xpose.msra.mxu0 0.0
    %59 = vmatpush.xpose.msra.mxu0 0.0
    %60 = vmatpush.xpose.msra.mxu0 0.0
    %61 = vmatpush.xpose.msra.mxu0 0.0
    %62 = vmatpush.xpose.msra.mxu0 0.0
    %63 = vmatpush.xpose.msra.mxu0 0.0
    %64 = vmatpush.xpose.msra.mxu0 0.0
    %65 = vmatpush.xpose.msra.mxu0 0.0
    %66 = vmatpush.xpose.msra.mxu0 0.0
    %67 = vmatpush.xpose.msra.mxu0 0.0
    %68 = vmatpush.xpose.msra.mxu0 0.0
    %69 = vmatpush.xpose.msra.mxu0 %v53
    %70 = vmatpush.xpose.msra.mxu0 %v50
    %71 = vmatmul.f32.gmra.mxu0 %v44
    %v72 = vpop.f32.mrf.mxu0
    %v73 = vadd.f32 0.0, %v72
    %74 = vmatmul.f32.gmra.mxu0 %v47
    %v75 = vpop.f32.mrf.mxu0
    %v76 = vadd.f32 0.0, %v75
    %77 = vdwg.mxu0
    %vm78 = vcmask 80896
    %v79 = vsel %vm78, %v73, -inf
    %80 = vmax.xlane.f32.xlu0 %v79
    %v81 = vpop.xlane.xlu0 %80
    %v82 = vsel %vm78, %v76, -inf
    %83 = vmax.xlane.f32.xlu0 %v82
    %v84 = vpop.xlane.xlu0 %83
    %v85 = vsub.f32 %v73, %v81
    %v86 = vsub.f32 %v76, %v84
    %v87 = vmul.f32 %v85, 1.442695
    %v88 = vpow.pop %v87
    %v89 = vmul.f32 %v86, 1.442695
    %v90 = vpow.pop %v89
    %v91 = vsel %vm78, %v88, 0.0
    %92 = vadd.xlane.f32.xlu0 %v91
    %v93 = vpop.xlane.xlu0 %92
    %v94 = vsel %vm78, %v90, 0.0
    %95 = vadd.xlane.f32.xlu0 %v94
    %v96 = vpop.xlane.xlu0 %95
    %v97 = vrcp.pop %v93
    %v98 = vrcp.pop %v96
    %v99 = vmul.f32 %v88, %v97
    %v100 = vmul.f32 %v90, %v98
    %v101 = vld [vmem:[%s3] sm:$0xff]
    %v102 = vld [vmem:[%s3 + $0x8] sm:$0xff]
    %v103 = vadd.s32 %v101, 2147483648
    %vm105 = vcmp.ge.s32.totalorder %v103, 2576980378
    %v106 = vadd.s32 %v102, 2147483648
    %vm108 = vcmp.ge.s32.totalorder %v106, 2576980378
    %v109 = vmul.f32 %v99, 1.1111112
    %v110 = vmul.f32 %v100, 1.1111112
    %v111 = vsel %vm105, %v109, 0.0
    %v112 = vsel %vm108, %v110, 0.0
    %v114 = vsel %vm78, %v111, 0
    %v117 = vsel %vm78, %v112, 0
    %vm119 = vcmask 1041408
    %v121 = vsel %vm119, %v41, 0
    %123 = vmatpush.msra.mxu0 0.0
    %124 = vmatpush.msra.mxu0 0.0
    %125 = vmatpush.msra.mxu0 0.0
    %126 = vmatpush.msra.mxu0 0.0
    %127 = vmatpush.msra.mxu0 0.0
    %128 = vmatpush.msra.mxu0 0.0
    %129 = vmatpush.msra.mxu0 0.0
    %130 = vmatpush.msra.mxu0 0.0
    %131 = vmatpush.msra.mxu0 0.0
    %132 = vmatpush.msra.mxu0 0.0
    %133 = vmatpush.msra.mxu0 0.0
    %134 = vmatpush.msra.mxu0 0.0
    %135 = vmatpush.msra.mxu0 0.0
    %136 = vmatpush.msra.mxu0 0.0
    %137 = vmatpush.msra.mxu0 %v121
    %138 = vmatpush.msra.mxu0 %v40
    %139 = vmatmul.f32.gmra.mxu0 %v114
    %v140 = vpop.f32.mrf.mxu0
    %v141 = vadd.f32 0.0, %v140
    %142 = vmatmul.f32.gmra.mxu0 %v117
    %v143 = vpop.f32.mrf.mxu0
    %v144 = vadd.f32 0.0, %v143
    %145 = vdwg.mxu0
    %146 = vst.msk [vmem:[#allocation5] sm:$0xff] %vm42, %v141
    %147 = vst.msk [vmem:[#allocation5 + $0x8] sm:$0xff] %vm42, %v144
    // Predicated region
    $region22: #{model_forward.1} parent=1 // pred_check
      _
    $region23: #{model_forward.1} parent=1 // pred_check_branch
      %149 = sbr.rel (0) target = $region25
    $region24: #{model_forward.1} parent=1 // pred_region
      %151 = vsyncadd [#allocation4], 0
      %s152 = sshll.u32 [#allocation5], 4
      %s153 = int_to_ptr.vmem [resolvable:$true] %s152
      %s154 = sshll.u32 %s4, 4
      %s155 = int_to_ptr.hbm [resolvable:$true] %s154
      %160 = dma.vmem_to_hbm [thread:$0]  %s153, 256, %s155, [#allocation4], 128, 128, 8
    $region25: #{model_forward.1} parent=1 // pred_fallthru
      _
    // Predicated region
    $region26: #{model_forward.1} parent=1 // pred_check
      _
    $region27: #{model_forward.1} parent=1 // pred_check_branch
      %162 = sbr.rel (0) target = $region29
    $region28: #{model_forward.1} parent=1 // pred_region
      %164 = dma.done [#allocation4], 256
    $region29: #{model_forward.1} parent=1 // pred_fallthru
      _
    %165 = vsyncpa [#allocation3], 1
    %166 = vsyncpa [#allocation4], 1

</llo_original>
